<compile_context>
chip_gen: v5e
topology: v5e:2x2
jax: 0.10.0
libtpu: 0.0.40
codegen_flags: <defaults>
</compile_context>

<pallas_src>
import numpy as np
import jax
import jax.numpy as jnp
from jax.experimental import pallas as pl
from jax.experimental.pallas import tpu as pltpu


# ------------------------- constant sinusoid table --------------------------

def sinusoid_table(n_position, d_hid):
    """Same math as PositionalEncoding._get_sinusoid_encoding_table (host-side)."""
    pos = np.arange(n_position)[:, None].astype(np.float64)
    hid = np.arange(d_hid)[None, :]
    angle = pos / np.power(10000.0, 2 * (hid // 2) / d_hid)
    table = np.zeros((n_position, d_hid), dtype=np.float64)
    table[:, 0::2] = np.sin(angle[:, 0::2])
    table[:, 1::2] = np.cos(angle[:, 1::2])
    return table


# ------------------------------ Pallas kernel -------------------------------

def _pos_encoding_kernel(x_ref, pos_ref, o_ref):
    # x block: (tb, tl, td); pos block: (tl, td), broadcast over the batch tile.
    o_ref[...] = x_ref[...] + pos_ref[...]


# ------------------------------- tiling utils -------------------------------

def _round_down(v, m):
    return (v // m) * m


def _sublane_align(dtype):
    # 8 rows/sublane-group for 4-byte, 16 for 2-byte, 32 for 1-byte dtypes.
    return max(8, 32 // jnp.dtype(dtype).itemsize)


def _vmem_plan():
    """(scoped_vmem_limit, block_byte_budget, tl_cap, td_cap) adapted to chip VMEM."""
    try:
        cap = int(getattr(pltpu.get_tpu_info(), "vmem_capacity_bytes", 64 << 20))
    except Exception:  # pragma: no cover - fall back to the smallest (v7x per-TC)
        cap = 64 << 20
    limit = min(64 << 20, cap // 2)          # 64 MiB on v5e/v6e, 32 MiB on v7x
    budget = (limit * 3) // 4                # leave headroom for Mosaic scratch
    if limit >= (64 << 20):
        return limit, budget, 1024, 2048     # roomy tiles on 128-MiB-VMEM chips
    return limit, budget, 512, 1024          # conservative tiles on v7x


# --------------------------------- wrapper -----------------------------------

def positional_encoding(x, pos_table, *, donate_x=False):
    """x: (B, L, D); pos_table: (n_position, D) with n_position >= L."""
    B, L, D = x.shape
    if pos_table.dtype != x.dtype:
        # Cast once up front; ideally the caller stores the table in x's dtype.
        pos_table = pos_table.astype(x.dtype)

    vmem_limit, budget, tl_cap, td_cap = _vmem_plan()
    align = _sublane_align(x.dtype)
    itemsize = jnp.dtype(x.dtype).itemsize

    # ---- lane-axis tile (last dim) ----
    if D % 128 == 0 and D > td_cap:
        td = _round_down(td_cap, 128)
    else:
        td = D                                # full-dim escape (covers D<128 / unaligned)

    # ---- sublane-axis tile (L) and which pos buffer to hand to pallas_call ----
    if L % align == 0:
        # No wrapper-side slice/copy: index the first L rows of the full table.
        pos_in = pos_table
        tl = min(L, _round_down(tl_cap, align))
    else:
        # Unaligned L: pre-slice so the "block == full dim" escape applies.
        pos_in = jax.lax.slice(pos_table, (0, 0), (L, D))
        tl = L if L <= tl_cap else _round_down(tl_cap, align)

    # ---- batch fold, bounded so 3 double-buffered streams fit the VMEM budget ----
    blk = tl * td * itemsize                  # bytes of one (tl, td) slab
    # 2 * (x block + out block) * tb + 2 * pos block  <= budget
    tb_vmem = max(1, int((budget // (2 * blk) - 1) // 2))
    tb = max(1, min(B, 8, tb_vmem))

    nl, nd, nb = pl.cdiv(L, tl), pl.cdiv(D, td), pl.cdiv(B, tb)
    if nl * nd * nb == 1 and B > 1:
        # Keep >= 2 grid points on a parallel axis so both v7x TCs get work.
        tb = (B + 1) // 2
        nb = pl.cdiv(B, tb)

    grid = (nl, nd, nb)                       # batch innermost -> pos block stays resident

    return pl.pallas_call(
        _pos_encoding_kernel,
        out_shape=jax.ShapeDtypeStruct((B, L, D), x.dtype),
        grid=grid,
        in_specs=[
            pl.BlockSpec((tb, tl, td), lambda i, j, b: (b, i, j)),
            # Independent of b: same pos block across consecutive (innermost) steps.
            pl.BlockSpec((tl, td), lambda i, j, b: (i, j)),
        ],
        out_specs=pl.BlockSpec((tb, tl, td), lambda i, j, b: (b, i, j)),
        input_output_aliases=({0: 0} if donate_x else {}),
        compiler_params=pltpu.CompilerParams(
            dimension_semantics=("parallel", "parallel", "parallel"),
            vmem_limit_bytes=vmem_limit,
        ),
    )(x, pos_in)


# ---------------------------------- main -------------------------------------

if __name__ == "__main__":
    d_hid, n_position = 32, 200
    B, L = 2, 8

    key = jax.random.PRNGKey(0)
    x = jax.random.normal(key, (B, L, d_hid), jnp.float32)
    pos_table = jnp.asarray(sinusoid_table(n_position, d_hid), jnp.float32)

    out = positional_encoding(x, pos_table)
    out = jax.block_until_ready(out)

    ref = x + pos_table[None, :L, :]
    assert out.shape == (B, L, d_hid)
    assert bool(jnp.all(jnp.isfinite(out)))
    assert bool(jnp.allclose(out, ref, atol=1e-6, rtol=1e-6))
    print("KERNEL_OK")
</pallas_src>

<mosaic_0001>
module attributes {stable_mosaic.version = 11 : i64} {
  func.func @_pos_encoding_kernel(%arg0: i32, %arg1: i32, %arg2: i32, %arg3: memref<1x8x32xf32, #tpu.memory_space<vmem>>, %arg4: memref<8x32xf32, #tpu.memory_space<vmem>>, %arg5: memref<1x8x32xf32, #tpu.memory_space<vmem>>) attributes {dimension_semantics = [#tpu.dimension_semantics<parallel>, #tpu.dimension_semantics<parallel>, #tpu.dimension_semantics<parallel>], iteration_bounds = array<i64: 1, 1, 2>, scalar_prefetch = 0 : i64, scratch_operands = 0 : i64, tpu.core_type = #tpu.core_type<tc>, window_params = [{transform_indices = @transform_0, window_bounds = array<i64: 1, 8, 32>}, {transform_indices = @transform_1, window_bounds = array<i64: 8, 32>}, {transform_indices = @transform_2, window_bounds = array<i64: 1, 8, 32>}]} {
    %c0 = arith.constant 0 : index
    %c0_0 = arith.constant 0 : index
    %c0_1 = arith.constant 0 : index
    %0 = vector.load %arg3[%c0, %c0_0, %c0_1] : memref<1x8x32xf32, #tpu.memory_space<vmem>>, vector<1x8x32xf32>
    %c0_2 = arith.constant 0 : index
    %c0_3 = arith.constant 0 : index
    %1 = vector.load %arg4[%c0_2, %c0_3] : memref<8x32xf32, #tpu.memory_space<vmem>>, vector<8x32xf32>
    %2 = vector.shape_cast %1 : vector<8x32xf32> to vector<1x8x32xf32>
    %3 = arith.addf %0, %2 : vector<1x8x32xf32>
    %c0_4 = arith.constant 0 : index
    %c0_5 = arith.constant 0 : index
    %c0_6 = arith.constant 0 : index
    %4 = vector.load %arg5[%c0_4, %c0_5, %c0_6] : memref<1x8x32xf32, #tpu.memory_space<vmem>>, vector<1x8x32xf32>
    tpu.vector_store %arg5[%c0_4, %c0_5, %c0_6], %3 {strides = array<i32>} : memref<1x8x32xf32, #tpu.memory_space<vmem>>, vector<1x8x32xf32>,
    return
  }
  func.func @transform_0(%arg0: i32, %arg1: i32, %arg2: i32) -> (i32, i32, i32) {
    %c0_i32 = arith.constant 0 : i32
    return %arg2, %arg0, %arg1 : i32, i32, i32
  }
  func.func @transform_1(%arg0: i32, %arg1: i32, %arg2: i32) -> (i32, i32) {
    %c0_i32 = arith.constant 0 : i32
    return %arg0, %arg1 : i32, i32
  }
  func.func @transform_2(%arg0: i32, %arg1: i32, %arg2: i32) -> (i32, i32, i32) {
    %c0_i32 = arith.constant 0 : i32
    return %arg2, %arg0, %arg1 : i32, i32, i32
  }
}

</mosaic_0001>

<llo_original>
// kernel: tpu_custom_call.1
$region0: #{tpu_custom_call.1}
  #allocation0 [shape = 'u32[]', space=smem, size = 0x4, offset = 0x4, fixed_abs, tag = 'smem constant byte address 0x4 - core index']
  #allocation1 [shape = 'u32[72,128]{1,0:T(1,128)}', space=vmem, size = 0x9000, scoped, tag = 'internal scratch']
  %s0 = inlined_call_operand.vmem [shape: f32[2,8,32], index: 0, kind: input, shape index: {}]
  %s1 = inlined_call_operand.vmem [shape: f32[200,32], index: 1, kind: input, shape index: {}]
  %s2 = inlined_call_operand.hbm [shape: f32[2,8,32], index: 2, kind: output, shape index: {}]
  %s3 = sld [smem:[#allocation0]]
  $region41: #{tpu_custom_call.1} parent=0
    _
  %s5 = ssub.s32 1, %s3
  %s6 = scalar_select 0, %s5, %s3
  $region1: #{tpu_custom_call.1} parent=0
    #allocation2 [shape = 'u8[8192]{0}', space=vmem, size = 0x2000, scoped, tag = 'output window, operand 0']
    #allocation3 [shape = 's32[2]{0}', space=sflag, size = 0x8, scoped, tag = 'scoped memory for tpu_custom_call.1']
    %7 = vsyncpa [#allocation3], 0
    %s8 = scalar_lea.sflag [#allocation3], 1
    %9 = vsyncpa %s8, 0
    loop: start=0, step=1, limit=4
    $region2: #{tpu_custom_call.1} parent=1 // loop_pre_header
      _
    $region3: #{tpu_custom_call.1} parent=1 // loop_header
      %s11 = sphi 0, %s15
      %p12 = scmp.ge.s32.totalorder %s11, 4
      %s18 = sphi 0, %s37
      %s19 = sphi 0, %s33
      %s20 = sphi 0, %s29
      %s21 = sphi 0, %s18
      %s22 = sphi 0, %s19
      %s23 = sphi 0, %s20
      %s24 = sphi 0, %s21
      %s25 = sphi 0, %s22
      %s26 = sphi 0, %s23
      %s44 = sphi 0, %s46
      %s47 = sphi 0, %s44
      %s48 = sphi 0, %s47
      %s64 = sphi 0, %s48
      %s72 = sphi 0, %s74
      %s75 = sphi 0, %s72
      %s76 = sphi 0, %s75
      %s92 = sphi 0, %s76
      %s102 = sphi 0, %s104
      %s105 = sphi 0, %s102
      %s106 = sphi 0, %s105
      %s122 = sphi 0, %s106
    $region4: #{tpu_custom_call.1} parent=1 // loop_header_branch
      %14 = sbr.rel (%p12) target = $region8
    $region5: #{tpu_custom_call.1} parent=1 // loop_body
      %s16 = ssub.s32 %s11, 1
      %s17 = ssub.s32 %s11, 2
      %s27 = sadd.s32 1, %s20
      %p28 = scmp.ge.s32.totalorder %s27, 2
      %s29 = scalar_select %p28, 0, %s27
      %s30 = sadd.s32 1, %s19
      %s31 = scalar_select %p28, %s30, %s19
      %p32 = scmp.ge.s32.totalorder %s31, 1
      %s33 = scalar_select %p32, 0, %s31
      %s34 = sadd.s32 1, %s18
      %s35 = scalar_select %p32, %s34, %s18
      %p36 = scmp.ge.s32.totalorder %s35, 1
      %s37 = scalar_select %p36, 0, %s35
      %s38 = ssub.s32 %s20, %s29
      %s39 = ssub.s32 %s18, %s37
      %s40 = sor.u32 %s38, %s39
      %s41 = ssub.s32 %s19, %s33
      %s42 = sor.u32 %s40, %s41
      %p43 = scmp.eq.s32.totalorder %s42, 0
      %s45 = sadd.s32 %s44, 1
      %s46 = scalar_select %p43, %s44, %s45
      %p49 = pneg %p43
      %p50 = scmp.eq.s32.totalorder %s11, 1
      %p51 = por %p49, %p50
      %p52 = scmp.ne.s32.totalorder %s44, %s47
      %p53 = scmp.eq.s32.totalorder %s11, 0
      %p54 = por %p52, %p53
      %p55 = scmp.ne.s32.totalorder %s44, %s47
      %p56 = scmp.eq.s32.totalorder %s16, 1
      %p57 = por %p55, %p56
      %p58 = scmp.ne.s32.totalorder %s47, %s48
      %p59 = scmp.eq.s32.totalorder %s16, 0
      %p60 = por %p58, %p59
      %p61 = scmp.ne.s32.totalorder %s47, %s48
      %p62 = scmp.eq.s32.totalorder %s17, 1
      %p63 = por %p61, %p62
      %p65 = scmp.ne.s32.totalorder %s48, %s64
      %p66 = scmp.eq.s32.totalorder %s17, 0
      %p67 = por %p65, %p66
      %s68 = ssub.s32 %s18, %s37
      %s69 = ssub.s32 %s19, %s33
      %s70 = sor.u32 %s68, %s69
      %p71 = scmp.eq.s32.totalorder %s70, 0
      %s73 = sadd.s32 %s72, 1
      %s74 = scalar_select %p71, %s72, %s73
      %p77 = pneg %p71
      %p78 = scmp.eq.s32.totalorder %s11, 1
      %p79 = por %p77, %p78
      %p80 = scmp.ne.s32.totalorder %s72, %s75
      %p81 = scmp.eq.s32.totalorder %s11, 0
      %p82 = por %p80, %p81
      %p83 = scmp.ne.s32.totalorder %s72, %s75
      %p84 = scmp.eq.s32.totalorder %s16, 1
      %p85 = por %p83, %p84
      %p86 = scmp.ne.s32.totalorder %s75, %s76
      %p87 = scmp.eq.s32.totalorder %s16, 0
      %p88 = por %p86, %p87
      %p89 = scmp.ne.s32.totalorder %s75, %s76
      %p90 = scmp.eq.s32.totalorder %s17, 1
      %p91 = por %p89, %p90
      %p93 = scmp.ne.s32.totalorder %s76, %s92
      %p94 = scmp.eq.s32.totalorder %s17, 0
      %p95 = por %p93, %p94
      %s96 = ssub.s32 %s20, %s29
      %s97 = ssub.s32 %s18, %s37
      %s98 = sor.u32 %s96, %s97
      %s99 = ssub.s32 %s19, %s33
      %s100 = sor.u32 %s98, %s99
      %p101 = scmp.eq.s32.totalorder %s100, 0
      %s103 = sadd.s32 %s102, 1
      %s104 = scalar_select %p101, %s102, %s103
      %p107 = pneg %p101
      %p108 = scmp.eq.s32.totalorder %s11, 1
      %p109 = por %p107, %p108
      %p110 = scmp.ne.s32.totalorder %s102, %s105
      %p111 = scmp.eq.s32.totalorder %s11, 0
      %p112 = por %p110, %p111
      %p113 = scmp.ne.s32.totalorder %s102, %s105
      %p114 = scmp.eq.s32.totalorder %s16, 1
      %p115 = por %p113, %p114
      %p116 = scmp.ne.s32.totalorder %s105, %s106
      %p117 = scmp.eq.s32.totalorder %s16, 0
      %p118 = por %p116, %p117
      %p119 = scmp.ne.s32.totalorder %s105, %s106
      %p120 = scmp.eq.s32.totalorder %s17, 1
      %p121 = por %p119, %p120
      %p123 = scmp.ne.s32.totalorder %s106, %s122
      %p124 = scmp.eq.s32.totalorder %s17, 0
      %p125 = por %p123, %p124
      %p126 = scmp.le.s32.totalorder 1, %s11
      %p127 = scmp.lt.s32.totalorder %s11, 3
      %p128 = pnand %p126, %p127
      %p129 = pneg %p128
      // Predicated region
      $region9: #{tpu_custom_call.1} parent=5 // pred_check
        _
      $region10: #{tpu_custom_call.1} parent=5 // pred_check_branch
        %131 = sbr.rel (%p128) target = $region12
      $region11: #{tpu_custom_call.1} parent=5 // pred_region
        %s132 = ssub.s32 %s11, 1
        // Predicated region
        $region13: #{tpu_custom_call.1} parent=11 // pred_check
          %p133 = pneg %p88
        $region14: #{tpu_custom_call.1} parent=11 // pred_check_branch
          %135 = sbr.rel (%p133) target = $region16
        $region15: #{tpu_custom_call.1} parent=11 // pred_region
          %p136 = scmp.lt.s32.totalorder %s21, 24
          %s137 = scalar_select %p136, %s21, 24
          %p138 = scmp.lt.s32.totalorder %s22, 0
          %s139 = scalar_select %p138, %s22, 0
          %s140 = sadd.s32 %s139, %s137
          %s141 = smul.addr %s140, 8
          %s142 = scalar_lea.vmem %s1, %s141
        $region16: #{tpu_custom_call.1} parent=11 // pred_fallthru
          _
      $region12: #{tpu_custom_call.1} parent=5 // pred_fallthru
        _
      %p143 = scmp.lt.s32.totalorder %s11, 2
      // Predicated region
      $region17: #{tpu_custom_call.1} parent=5 // pred_check
        %p144 = pneg %p143
      $region18: #{tpu_custom_call.1} parent=5 // pred_check_branch
        %146 = sbr.rel (%p144) target = $region20
      $region19: #{tpu_custom_call.1} parent=5 // pred_region
        // Predicated region
        $region21: #{tpu_custom_call.1} parent=19 // pred_check
          %p147 = pneg %p54
        $region22: #{tpu_custom_call.1} parent=19 // pred_check_branch
          %149 = sbr.rel (%p147) target = $region24
        $region23: #{tpu_custom_call.1} parent=19 // pred_region
          %p150 = scmp.lt.s32.totalorder %s20, 1
          %s151 = scalar_select %p150, %s20, 1
          %p152 = scmp.lt.s32.totalorder %s18, 0
          %s153 = scalar_select %p152, %s18, 0
          %p154 = scmp.lt.s32.totalorder %s19, 0
          %s155 = scalar_select %p154, %s19, 0
          %s156 = sadd.s32 %s155, %s153
          %s157 = sadd.s32 %s156, %s151
          %s158 = smul.addr %s157, 8
          %s159 = scalar_lea.vmem %s0, %s158
        $region24: #{tpu_custom_call.1} parent=19 // pred_fallthru
          _
      $region20: #{tpu_custom_call.1} parent=5 // pred_fallthru
        _
      %p160 = scmp.le.s32.totalorder 1, %s11
      %p161 = scmp.lt.s32.totalorder %s11, 3
      %p162 = pnand %p160, %p161
      %p163 = pneg %p162
      // Predicated region
      $region25: #{tpu_custom_call.1} parent=5 // pred_check
        _
      $region26: #{tpu_custom_call.1} parent=5 // pred_check_branch
        %165 = sbr.rel (%p162) target = $region28
      $region27: #{tpu_custom_call.1} parent=5 // pred_region
        %s166 = ssub.s32 %s11, 1
        %p167 = scmp.lt.s32.totalorder %s23, 1
        %s168 = scalar_select %p167, %s23, 1
        %p169 = scmp.lt.s32.totalorder %s21, 0
        %s170 = scalar_select %p169, %s21, 0
        %p171 = scmp.lt.s32.totalorder %s22, 0
        %s172 = scalar_select %p171, %s22, 0
        %s173 = sadd.s32 %s172, %s170
        %s174 = sadd.s32 %s173, %s168
        %s175 = smul.addr %s174, 8
        %s176 = scalar_lea.vmem %s0, %s175
        %p177 = pneg %p60
        %p178 = pneg %p57
        %p179 = scmp.lt.s32.totalorder %s21, 24
        %s180 = scalar_select %p179, %s21, 24
        %p181 = scmp.lt.s32.totalorder %s22, 0
        %s182 = scalar_select %p181, %s22, 0
        %s183 = sadd.s32 %s182, %s180
        %s184 = smul.addr %s183, 8
        %s185 = scalar_lea.vmem %s1, %s184
        %p186 = pneg %p88
        %p187 = pneg %p85
        %p188 = pneg %p118
        %p189 = pneg %p115
        %s190 = sand.u32 %s105, 1
        %s191 = scalar_lea.sflag [#allocation3], %s190
        %s192 = sand.u32 %s105, 1
        %s193 = smul.addr %s192, 8
        %s194 = scalar_lea.vmem [#allocation2], %s193
        %p195 = scmp.lt.s32.totalorder %s23, 1
        %s196 = scalar_select %p195, %s23, 1
        %p197 = scmp.lt.s32.totalorder %s21, 0
        %s198 = scalar_select %p197, %s21, 0
        %p199 = scmp.lt.s32.totalorder %s22, 0
        %s200 = scalar_select %p199, %s22, 0
        %s201 = sadd.s32 %s200, %s198
        %s202 = sadd.s32 %s201, %s196
        %s203 = smul.addr %s202, 8
        %s204 = scalar_lea.vmem %s0, %s203
        %p205 = scmp.lt.s32.totalorder %s21, 24
        %s206 = scalar_select %p205, %s21, 24
        %p207 = scmp.lt.s32.totalorder %s22, 0
        %s208 = scalar_select %p207, %s22, 0
        %s209 = sadd.s32 %s208, %s206
        %s210 = smul.addr %s209, 8
        %s211 = scalar_lea.vmem %s1, %s210
        %v212 = vld [vmem:[%s204] sm:$0xff]
        %v213 = vld [vmem:[%s211] sm:$0xff]
        %v214 = vadd.f32 %v212, %v213
        %vm215 = vcmask 261120
        %216 = vst.msk [vmem:[%s194] sm:$0xff] %vm215, %v214
        %s217 = sand.u32 %s105, 1
        %s218 = scalar_lea.sflag [#allocation3], %s217
        %s219 = sand.u32 %s105, 1
        %s220 = smul.addr %s219, 8
        %s221 = scalar_lea.vmem [#allocation2], %s220
        // Predicated region
        $region29: #{tpu_custom_call.1} parent=27 // pred_check
          %p222 = pneg %p115
        $region30: #{tpu_custom_call.1} parent=27 // pred_check_branch
          %224 = sbr.rel (%p222) target = $region32
        $region31: #{tpu_custom_call.1} parent=27 // pred_region
          %226 = vsyncadd %s218, 0
          %s227 = sadd.s32 %s22, %s21
          %s228 = sadd.s32 %s227, %s23
          %s229 = smul.addr %s228, 8
          %s230 = scalar_lea.hbm %s2, %s229
          %s232 = sshll.u32 %s221, 4
          %s233 = int_to_ptr.vmem [resolvable:$true] %s232
          %s234 = sshll.u32 %s230, 4
          %s235 = int_to_ptr.hbm [resolvable:$true] %s234
          %237 = dma.vmem_to_hbm [thread:$0]  %s233, 128, %s235, %s218
        $region32: #{tpu_custom_call.1} parent=27 // pred_fallthru
          _
      $region28: #{tpu_custom_call.1} parent=5 // pred_fallthru
        _
      %p238 = scmp.le.s32.totalorder 2, %s11
      // Predicated region
      $region33: #{tpu_custom_call.1} parent=5 // pred_check
        %p239 = pneg %p238
      $region34: #{tpu_custom_call.1} parent=5 // pred_check_branch
        %241 = sbr.rel (%p239) target = $region36
      $region35: #{tpu_custom_call.1} parent=5 // pred_region
        %s242 = ssub.s32 %s11, 2
        // Predicated region
        $region37: #{tpu_custom_call.1} parent=35 // pred_check
          %p243 = pneg %p121
        $region38: #{tpu_custom_call.1} parent=35 // pred_check_branch
          %245 = sbr.rel (%p243) target = $region40
        $region39: #{tpu_custom_call.1} parent=35 // pred_region
          %s246 = sand.u32 %s106, 1
          %s247 = scalar_lea.sflag [#allocation3], %s246
          %s248 = sand.u32 %s106, 1
          %s249 = smul.addr %s248, 8
          %s250 = scalar_lea.vmem [#allocation2], %s249
          %252 = dma.done %s247, 128
        $region40: #{tpu_custom_call.1} parent=35 // pred_fallthru
          _
      $region36: #{tpu_custom_call.1} parent=5 // pred_fallthru
        _
    $region6: #{tpu_custom_call.1} parent=1 // loop_footer
      %s15 = sadd.s32 1, %s11
    $region7: #{tpu_custom_call.1} parent=1 // loop_footer_branch
      %10 = sbr.rel target = $region3
    $region8: #{tpu_custom_call.1} parent=1 // loop_exit
      _
    %253 = vsyncpa [#allocation3], 1
    %s254 = scalar_lea.sflag [#allocation3], 1
    %255 = vsyncpa %s254, 1

</llo_original>
